<compile_context>
chip_gen: v5e
topology: v5e:2x2
jax: 0.10.0
libtpu: 0.0.40
codegen_flags: <defaults>
</compile_context>

<pallas_src>
import math
from functools import partial

import jax
import jax.numpy as jnp
from jax.experimental import pallas as pl
from jax.experimental.pallas import tpu as pltpu


def _identity_kernel(x_ref, o_ref):
    # Whole-tile VMEM copy — lane-dense, full-width loads/stores.
    o_ref[...] = x_ref[...]


_MAX_LANE_WIDTH = 1024   # 8 * 128: large multiple of 128 -> unmasked `vst`
_VMEM_BUDGET = 16 << 20  # budget for 4x tile bytes (double-buffered in + out);
                         # conservative for v5e/v6e (128 MiB) and v7x (64 MiB)


def _pick_lane_width(total: int) -> int:
    """Largest lane width (multiple of 128, capped at 1024) dividing `total`.

    Returns 0 if no multiple of 128 divides `total`.
    """
    lw = _MAX_LANE_WIDTH
    while lw >= 128:
        if total % lw == 0:
            return lw
        lw //= 2
    return 0


def _pick_tile_rows(rows: int, lane_width: int, itemsize: int,
                    sublane_align: int) -> int:
    """Tile rows: biggest tile under the VMEM budget, but >= 2 grid steps for
    mid-size inputs so v7x can shard the parallel axis across its 2 TCs."""
    max_tile_rows = _VMEM_BUDGET // (4 * lane_width * itemsize)
    max_tile_rows = max(sublane_align,
                        (max_tile_rows // sublane_align) * sublane_align)
    if rows > max_tile_rows:
        return max_tile_rows
    if rows >= 2 * sublane_align:
        # Split into (at least) two steps; ~0.35 us extra per step, up to ~2x
        # HBM bandwidth on v7x's two TensorCores.
        return pl.cdiv(pl.cdiv(rows, 2), sublane_align) * sublane_align
    return rows  # tiny input: single full-extent block (always layout-legal)


def _identity_copy_2d(x2d: jax.Array, tile_rows: int, alias: bool) -> jax.Array:
    rows, lane_width = x2d.shape
    itemsize = jnp.dtype(x2d.dtype).itemsize
    tile_bytes = tile_rows * lane_width * itemsize
    # Explicit scoped-VMEM limit: 4 buffers (double-buffered in + out) + slack.
    vmem_limit = max(16 << 20, 4 * tile_bytes + (2 << 20))
    grid = (pl.cdiv(rows, tile_rows),)
    return pl.pallas_call(
        _identity_kernel,
        out_shape=jax.ShapeDtypeStruct((rows, lane_width), x2d.dtype),
        grid=grid,
        in_specs=[pl.BlockSpec((tile_rows, lane_width), lambda i: (i, 0))],
        out_specs=pl.BlockSpec((tile_rows, lane_width), lambda i: (i, 0)),
        compiler_params=pltpu.CompilerParams(
            dimension_semantics=("parallel",),
            vmem_limit_bytes=vmem_limit,
        ),
        # Identity: optionally alias the input slab as the output buffer.
        input_output_aliases={0: 0} if alias else {},
    )(x2d)


@partial(jax.jit, static_argnames=("donate_slab",))
def base_model_forward(x_tensor: jax.Array, *,
                       donate_slab: bool = False) -> jax.Array:
    """Identity forward pass of the abstract BaseModel, as a Pallas kernel.

    donate_slab=True aliases the (reshaped) input as the kernel output; only
    enable it when the caller actually donates x (e.g. jit donate_argnums),
    otherwise XLA inserts a defensive copy.
    """
    orig_shape = x_tensor.shape
    dtype = x_tensor.dtype
    itemsize = jnp.dtype(dtype).itemsize
    total = math.prod(orig_shape) if orig_shape else 1
    # Sublane packing multiple: 8 for 32-bit, 16 for 16-bit, 32 for 8-bit.
    sublane_align = max(8, 32 // max(itemsize, 1))

    lane_width = _pick_lane_width(total)

    if lane_width:
        # Common path: element count divisible by 128 -> lane-dense 2-D slab,
        # no padding and no trailing slice.
        rows = total // lane_width
        tile_rows = _pick_tile_rows(rows, lane_width, itemsize, sublane_align)
        x2d = x_tensor.reshape(rows, lane_width)
        out2d = _identity_copy_2d(x2d, tile_rows, donate_slab)
        return out2d.reshape(orig_shape)

    if 4 * total * itemsize <= _VMEM_BUDGET:
        # Small, not 128-divisible: one full-extent (1, total) block.  Masked
        # partial stores, but no wrapper pad/slice HBM traffic at all.
        x2d = x_tensor.reshape(1, total)
        out2d = _identity_copy_2d(x2d, 1, donate_slab)
        return out2d.reshape(orig_shape)

    # Rare path: large AND element count not a multiple of 128.  Pad the flat
    # slab minimally to a lane-dense width and slice the result back.
    # TODO(synk): handle the <128-element remainder with an in-kernel masked
    #             tail store instead of padding, if this path ever matters.
    lane_width = 128
    rows = pl.cdiv(total, lane_width)
    padded_total = rows * lane_width
    flat = jnp.pad(x_tensor.reshape(total), (0, padded_total - total))
    x2d = flat.reshape(rows, lane_width)
    tile_rows = _pick_tile_rows(rows, lane_width, itemsize, sublane_align)
    out2d = _identity_copy_2d(x2d, tile_rows, True)  # padded temp is dead after
    return out2d.reshape(padded_total)[:total].reshape(orig_shape)


if __name__ == "__main__":
    # 1) Aligned NCHW input consistent with a conv-style model:
    #    batch=2, channels=4, spatial=16x16 -> 2048 elems -> lane width 1024.
    x = jax.random.normal(jax.random.PRNGKey(0), (2, 4, 16, 16),
                          dtype=jnp.float32)
    y = jax.block_until_ready(base_model_forward(x))
    assert y.shape == x.shape and y.dtype == x.dtype
    assert bool(jnp.all(y == x))

    # 2) Mid-size input: 32 rows of 1024 -> split into 2 grid steps (v7x TCs).
    x2 = jax.random.normal(jax.random.PRNGKey(1), (4, 8, 32, 32),
                           dtype=jnp.float32)
    y2 = jax.block_until_ready(base_model_forward(x2))
    assert y2.shape == x2.shape and bool(jnp.all(y2 == x2))

    # 3) Split with a partial trailing block: 20 rows -> tiles of 16 (16 + 4).
    x3 = jax.random.normal(jax.random.PRNGKey(2), (5, 4, 32, 32),
                           dtype=jnp.float32)
    y3 = jax.block_until_ready(base_model_forward(x3))
    assert y3.shape == x3.shape and bool(jnp.all(y3 == x3))

    # 4) Small fully-unaligned input (210 elems): single full-extent block,
    #    no pad / slice wrapper copies.
    x4 = jax.random.normal(jax.random.PRNGKey(3), (2, 3, 5, 7),
                           dtype=jnp.float32)
    y4 = jax.block_until_ready(base_model_forward(x4))
    assert y4.shape == x4.shape and bool(jnp.all(y4 == x4))

    print("KERNEL_OK")
</pallas_src>

<mosaic_0001>
module attributes {stable_mosaic.version = 11 : i64} {
  func.func @_identity_kernel(%arg0: i32, %arg1: memref<2x1024xf32, #tpu.memory_space<vmem>>, %arg2: memref<2x1024xf32, #tpu.memory_space<vmem>>) attributes {dimension_semantics = [#tpu.dimension_semantics<parallel>], iteration_bounds = array<i64: 1>, scalar_prefetch = 0 : i64, scratch_operands = 0 : i64, tpu.core_type = #tpu.core_type<tc>, window_params = [{transform_indices = @transform_0, window_bounds = array<i64: 2, 1024>}, {transform_indices = @transform_1, window_bounds = array<i64: 2, 1024>}]} {
    %c0 = arith.constant 0 : index
    %c0_0 = arith.constant 0 : index
    %0 = vector.load %arg1[%c0, %c0_0] : memref<2x1024xf32, #tpu.memory_space<vmem>>, vector<2x1024xf32>
    %c0_1 = arith.constant 0 : index
    %c0_2 = arith.constant 0 : index
    %1 = vector.load %arg2[%c0_1, %c0_2] : memref<2x1024xf32, #tpu.memory_space<vmem>>, vector<2x1024xf32>
    tpu.vector_store %arg2[%c0_1, %c0_2], %0 {strides = array<i32>} : memref<2x1024xf32, #tpu.memory_space<vmem>>, vector<2x1024xf32>,
    return
  }
  func.func @transform_0(%arg0: i32) -> (i32, i32) {
    %c0_i32 = arith.constant 0 : i32
    %c0_i32_0 = arith.constant 0 : i32
    return %arg0, %c0_i32 : i32, i32
  }
  func.func @transform_1(%arg0: i32) -> (i32, i32) {
    %c0_i32 = arith.constant 0 : i32
    %c0_i32_0 = arith.constant 0 : i32
    return %arg0, %c0_i32 : i32, i32
  }
}

</mosaic_0001>

<llo_original>
// kernel: base_model_forward.1
$region0: #{base_model_forward.1}
  #allocation0 [shape = 'u32[]', space=smem, size = 0x4, offset = 0x4, fixed_abs, tag = 'smem constant byte address 0x4 - core index']
  #allocation1 [shape = 'u32[72,128]{1,0:T(1,128)}', space=vmem, size = 0x9000, scoped, tag = 'internal scratch']
  %s0 = inlined_call_operand.vmem [shape: f32[2,1024], index: 0, kind: input, shape index: {}]
  %s1 = inlined_call_operand.vmem [shape: f32[2,1024], index: 1, kind: output, shape index: {}]
  %s2 = sld [smem:[#allocation0]]
  $region14: #{base_model_forward.1} parent=0
    _
  %s4 = ssub.s32 1, %s2
  %s5 = scalar_select 0, %s4, %s2
  // Predicated region
  $region2: #{base_model_forward.1} parent=0 // pred_check
    _
  $region3: #{base_model_forward.1} parent=0 // pred_check_branch
    %7 = sbr.rel (0) target = $region5
  $region4: #{base_model_forward.1} parent=0 // pred_region
    _
  $region5: #{base_model_forward.1} parent=0 // pred_fallthru
    _
  %v8 = vld [vmem:[%s0] sm:$0xff]
  %v9 = vld [vmem:[%s0 + $0x8] sm:$0xff]
  %10 = vst [vmem:[%s1] sm:$0xff] %v8
  %11 = vst [vmem:[%s1 + $0x8] sm:$0xff] %v9
  // Predicated region
  $region6: #{base_model_forward.1} parent=0 // pred_check
    _
  $region7: #{base_model_forward.1} parent=0 // pred_check_branch
    %13 = sbr.rel (0) target = $region9
  $region8: #{base_model_forward.1} parent=0 // pred_region
    _
  $region9: #{base_model_forward.1} parent=0 // pred_fallthru
    _
  // Predicated region
  $region10: #{base_model_forward.1} parent=0 // pred_check
    _
  $region11: #{base_model_forward.1} parent=0 // pred_check_branch
    %15 = sbr.rel (0) target = $region13
  $region12: #{base_model_forward.1} parent=0 // pred_region
    _
  $region13: #{base_model_forward.1} parent=0 // pred_fallthru
    _

</llo_original>
